<compile_context>
chip_gen: v6e
topology: v6e:2x2x1
jax: 0.10.0
libtpu: 0.0.40
codegen_flags: <defaults>
</compile_context>

<pallas_src>
import numpy as np
import jax
import jax.numpy as jnp
from jax.experimental import pallas as pl
from jax.experimental.pallas import tpu as pltpu


# ------------------------------ kernel ---------------------------------------
def _soft_pos_embed_kernel(x_ref, grid_ref, w_ref, b_ref, o_ref):
    # x_ref   : (1, N_p, C_p)   one batch element, packed lane-dense layout
    # grid_ref: (N_p, 4*P)      packed position grid (shared across batch)
    # w_ref   : (4*P, C_p)      block-diagonal packed Linear weight (pre-transposed)
    # b_ref   : (1, C_p)        packed Linear bias
    ge = jnp.dot(grid_ref[...], w_ref[...], preferred_element_type=jnp.float32)
    ge = ge + b_ref[...]                       # (N_p, C_p) grid embedding
    o_ref[0] = (x_ref[0] + ge).astype(o_ref.dtype)


# ------------------------------ wrapper ---------------------------------------
def _pack_factor(n_tokens, hidden):
    # Pack P spatial positions per row so the last dim is a multiple of 128.
    if hidden < 128 and 128 % hidden == 0 and n_tokens % (128 // hidden) == 0:
        return 128 // hidden
    return 1


def _pack_embedding(grid_flat, w, b, pack):
    # grid_flat: (N, 4), w: (4, C), b: (C,)
    n_tok, feat = grid_flat.shape
    hidden = w.shape[1]
    grid_p = grid_flat.reshape(n_tok // pack, feat * pack)
    w_p = jnp.zeros((feat * pack, pack * hidden), w.dtype)
    for i in range(pack):                      # block-diagonal: chunk i -> cols i*C:(i+1)*C
        w_p = w_p.at[i * feat:(i + 1) * feat, i * hidden:(i + 1) * hidden].set(w)
    b_p = jnp.tile(b.reshape(1, hidden), (1, pack))
    return grid_p, w_p, b_p


def soft_position_embed(inputs, grid_flat, w, b):
    # inputs: (B, H, W, C); grid_flat: (H*W, 4); w: (4, C); b: (C,)
    bsz, h, wd, hidden = inputs.shape
    n_tok = h * wd
    feat = grid_flat.shape[-1]

    pack = _pack_factor(n_tok, hidden)
    n_p, c_p = n_tok // pack, hidden * pack

    x_p = inputs.reshape(bsz, n_p, c_p)        # row-major: pure layout plumbing
    grid_p, w_p, b_p = _pack_embedding(grid_flat, w, b, pack)

    out = pl.pallas_call(
        _soft_pos_embed_kernel,
        out_shape=jax.ShapeDtypeStruct((bsz, n_p, c_p), inputs.dtype),
        grid_spec=pltpu.PrefetchScalarGridSpec(
            num_scalar_prefetch=0,
            grid=(bsz,),
            in_specs=[
                pl.BlockSpec((1, n_p, c_p), lambda i: (i, 0, 0)),   # inputs (per batch)
                pl.BlockSpec((n_p, feat * pack), lambda i: (0, 0)), # packed grid
                pl.BlockSpec((feat * pack, c_p), lambda i: (0, 0)), # packed weight
                pl.BlockSpec((1, c_p), lambda i: (0, 0)),           # packed bias
            ],
            out_specs=pl.BlockSpec((1, n_p, c_p), lambda i: (i, 0, 0)),
        ),
        compiler_params=pltpu.CompilerParams(
            dimension_semantics=("parallel",)),   # v7x: one batch element per TC
    )(x_p, grid_p, w_p, b_p)

    return out.reshape(bsz, h, wd, hidden)


# --------------------------- grid construction --------------------------------
def build_grid_flat(resolution):
    # Faithful to build_grid(): linspace, meshgrid(indexing='ij'), cat [g, 1-g].
    ranges = [np.linspace(0.0, 1.0, num=r) for r in resolution]
    g = np.meshgrid(*ranges, sparse=False, indexing="ij")
    g = np.stack(g, axis=-1).reshape(resolution[0], resolution[1], -1)
    g = np.concatenate([g, 1.0 - g], axis=-1).astype(np.float32)   # (H, W, 4)
    return jnp.asarray(g.reshape(-1, 4))                           # (H*W, 4)


# --------------------------------- main ---------------------------------------
if __name__ == "__main__":
    B, H, W_RES, HIDDEN = 2, 16, 16, 64

    key = jax.random.PRNGKey(0)
    k_x, k_w, k_b = jax.random.split(key, 3)

    inputs = jax.random.normal(k_x, (B, H, W_RES, HIDDEN), jnp.float32)

    # nn.Linear(4, hidden) init: U(-1/sqrt(4), 1/sqrt(4)); stored as (in, out).
    bound = 1.0 / np.sqrt(4.0)
    w = jax.random.uniform(k_w, (4, HIDDEN), jnp.float32, -bound, bound)
    b = jax.random.uniform(k_b, (HIDDEN,), jnp.float32, -bound, bound)

    grid_flat = build_grid_flat((H, W_RES))     # (H*W, 4)

    out = soft_position_embed(inputs, grid_flat, w, b)
    jax.block_until_ready(out)

    # Pure-JAX reference check of forward semantics.
    ge_ref = grid_flat @ w + b[None, :]                          # (H*W, C)
    expected = inputs + ge_ref.reshape(1, H, W_RES, HIDDEN)
    np.testing.assert_allclose(np.asarray(out), np.asarray(expected),
                               rtol=5e-3, atol=5e-3)

    assert out.shape == (B, H, W_RES, HIDDEN)
    assert np.all(np.isfinite(np.asarray(out)))
    print("KERNEL_OK")
</pallas_src>

<mosaic_0001>
module attributes {stable_mosaic.version = 11 : i64} {
  func.func @_soft_pos_embed_kernel(%arg0: i32, %arg1: memref<1x128x128xf32, #tpu.memory_space<vmem>>, %arg2: memref<128x8xf32, #tpu.memory_space<vmem>>, %arg3: memref<8x128xf32, #tpu.memory_space<vmem>>, %arg4: memref<1x128xf32, #tpu.memory_space<vmem>>, %arg5: memref<1x128x128xf32, #tpu.memory_space<vmem>>) attributes {dimension_semantics = [#tpu.dimension_semantics<parallel>], iteration_bounds = array<i64: 2>, scalar_prefetch = 0 : i64, scratch_operands = 0 : i64, tpu.core_type = #tpu.core_type<tc>, window_params = [{transform_indices = @transform_0, window_bounds = array<i64: 1, 128, 128>}, {pipeline_mode = #tpu.pipeline_mode<synchronous>, transform_indices = @transform_1, window_bounds = array<i64: 128, 8>}, {pipeline_mode = #tpu.pipeline_mode<synchronous>, transform_indices = @transform_2, window_bounds = array<i64: 8, 128>}, {pipeline_mode = #tpu.pipeline_mode<synchronous>, transform_indices = @transform_3, window_bounds = array<i64: 1, 128>}, {transform_indices = @transform_4, window_bounds = array<i64: 1, 128, 128>}]} {
    %c0 = arith.constant 0 : index
    %c0_0 = arith.constant 0 : index
    %0 = vector.load %arg2[%c0, %c0_0] : memref<128x8xf32, #tpu.memory_space<vmem>>, vector<128x8xf32>
    %c0_1 = arith.constant 0 : index
    %c0_2 = arith.constant 0 : index
    %1 = vector.load %arg3[%c0_1, %c0_2] : memref<8x128xf32, #tpu.memory_space<vmem>>, vector<8x128xf32>
    %cst = arith.constant dense<0.000000e+00> : vector<128x128xf32>
    %2 = tpu.matmul %0, %1, %cst {dimension_numbers = #tpu.dot_dimension_numbers<[1], [0], [0], [1], [0, 0, 1, 1], [], []>} : vector<128x8xf32>, vector<8x128xf32>, vector<128x128xf32> -> vector<128x128xf32>
    %c0_3 = arith.constant 0 : index
    %c0_4 = arith.constant 0 : index
    %3 = vector.load %arg4[%c0_3, %c0_4] : memref<1x128xf32, #tpu.memory_space<vmem>>, vector<1x128xf32>
    %4 = vector.broadcast %3 : vector<1x128xf32> to vector<128x128xf32>
    %5 = arith.addf %2, %4 : vector<128x128xf32>
    %c0_5 = arith.constant 0 : index
    %c0_6 = arith.constant 0 : index
    %c0_7 = arith.constant 0 : index
    %6 = vector.load %arg1[%c0_5, %c0_6, %c0_7] : memref<1x128x128xf32, #tpu.memory_space<vmem>>, vector<1x128x128xf32>
    %7 = vector.shape_cast %6 : vector<1x128x128xf32> to vector<128x128xf32>
    %8 = arith.addf %7, %5 : vector<128x128xf32>
    %c0_8 = arith.constant 0 : index
    %c0_9 = arith.constant 0 : index
    %c0_10 = arith.constant 0 : index
    %9 = vector.load %arg5[%c0_8, %c0_9, %c0_10] : memref<1x128x128xf32, #tpu.memory_space<vmem>>, vector<1x128x128xf32>
    %10 = vector.shape_cast %9 : vector<1x128x128xf32> to vector<128x128xf32>
    %11 = vector.shape_cast %8 : vector<128x128xf32> to vector<1x128x128xf32>
    tpu.vector_store %arg5[%c0_8, %c0_9, %c0_10], %11 {strides = array<i32>} : memref<1x128x128xf32, #tpu.memory_space<vmem>>, vector<1x128x128xf32>,
    return
  }
  func.func @transform_0(%arg0: i32) -> (i32, i32, i32) {
    %c0_i32 = arith.constant 0 : i32
    %c0_i32_0 = arith.constant 0 : i32
    %c0_i32_1 = arith.constant 0 : i32
    return %arg0, %c0_i32, %c0_i32_0 : i32, i32, i32
  }
  func.func @transform_1(%arg0: i32) -> (i32, i32) {
    %c0_i32 = arith.constant 0 : i32
    %c0_i32_0 = arith.constant 0 : i32
    %c0_i32_1 = arith.constant 0 : i32
    return %c0_i32, %c0_i32_0 : i32, i32
  }
  func.func @transform_2(%arg0: i32) -> (i32, i32) {
    %c0_i32 = arith.constant 0 : i32
    %c0_i32_0 = arith.constant 0 : i32
    %c0_i32_1 = arith.constant 0 : i32
    return %c0_i32, %c0_i32_0 : i32, i32
  }
  func.func @transform_3(%arg0: i32) -> (i32, i32) {
    %c0_i32 = arith.constant 0 : i32
    %c0_i32_0 = arith.constant 0 : i32
    %c0_i32_1 = arith.constant 0 : i32
    return %c0_i32, %c0_i32_0 : i32, i32
  }
  func.func @transform_4(%arg0: i32) -> (i32, i32, i32) {
    %c0_i32 = arith.constant 0 : i32
    %c0_i32_0 = arith.constant 0 : i32
    %c0_i32_1 = arith.constant 0 : i32
    return %arg0, %c0_i32, %c0_i32_0 : i32, i32, i32
  }
}

</mosaic_0001>

<llo_original>
// kernel: tpu_custom_call.1
$region0: #{tpu_custom_call.1}
  #allocation0 [shape = 'u32[]', space=smem, size = 0x4, offset = 0x4, fixed_abs, tag = 'smem constant byte address 0x4 - core index']
  #allocation1 [shape = 'u32[144,128]{1,0:T(1,128)}', space=vmem, size = 0x12000, scoped, tag = 'internal scratch']
  %s0 = inlined_call_operand.hbm [shape: f32[2,128,128], index: 0, kind: input, shape index: {}]
  %s1 = inlined_call_operand.vmem [shape: f32[128,8], index: 1, kind: input, shape index: {}]
  %s2 = inlined_call_operand.vmem [shape: f32[8,128], index: 2, kind: input, shape index: {}]
  %s3 = inlined_call_operand.vmem [shape: f32[1,128], index: 3, kind: input, shape index: {}]
  %s4 = inlined_call_operand.hbm [shape: f32[2,128,128], index: 4, kind: output, shape index: {}]
  %s5 = sld [smem:[#allocation0]]
  $region53: #{tpu_custom_call.1} parent=0
    _
  %s7 = ssub.s32 1, %s5
  %s8 = scalar_select 0, %s7, %s5
  $region1: #{tpu_custom_call.1} parent=0
    #allocation2 [shape = 'u8[131072]{0}', space=vmem, size = 0x20000, scoped, tag = 'input window, operand 0']
    #allocation3 [shape = 's32[2]{0}', space=sflag, size = 0x8, scoped, tag = 'scoped memory for tpu_custom_call.1']
    #allocation4 [shape = 's32[2]{0}', space=sflag, size = 0x8, scoped, tag = 'scoped memory for tpu_custom_call.1']
    #allocation5 [shape = 'u8[131072]{0}', space=vmem, size = 0x20000, scoped, tag = 'output window, operand 0']
    %9 = vsyncpa [#allocation3], 0
    %s10 = scalar_lea.sflag [#allocation3], 1
    %11 = vsyncpa %s10, 0
    %12 = vsyncpa [#allocation4], 0
    %s13 = scalar_lea.sflag [#allocation4], 1
    %14 = vsyncpa %s13, 0
    loop: start=0, step=1, limit=4
    $region2: #{tpu_custom_call.1} parent=1 // loop_pre_header
      _
    $region3: #{tpu_custom_call.1} parent=1 // loop_header
      %s16 = sphi 0, %s20
      %p17 = scmp.ge.s32.totalorder %s16, 4
      %s26 = sphi 0, %s28
      %s29 = sphi 0, %s26
      %s30 = sphi 0, %s29
      %s46 = sphi 0, %s30
      %s50 = sphi 0, %s50
      %s52 = sphi 0, %s50
      %s53 = sphi 0, %s52
      %s67 = sphi 0, %s53
      %s71 = sphi 0, %s71
      %s73 = sphi 0, %s71
      %s74 = sphi 0, %s73
      %s88 = sphi 0, %s74
      %s92 = sphi 0, %s92
      %s94 = sphi 0, %s92
      %s95 = sphi 0, %s94
      %s109 = sphi 0, %s95
      %s115 = sphi 0, %s117
      %s118 = sphi 0, %s115
      %s119 = sphi 0, %s118
      %s135 = sphi 0, %s119
    $region4: #{tpu_custom_call.1} parent=1 // loop_header_branch
      %19 = sbr.rel (%p17) target = $region8
    $region5: #{tpu_custom_call.1} parent=1 // loop_body
      %s21 = ssub.s32 %s16, 1
      %s22 = ssub.s32 %s16, 2
      %s23 = sadd.s32 %s16, 1
      %s24 = ssub.s32 %s16, %s23
      %p25 = scmp.eq.s32.totalorder %s24, 0
      %s27 = sadd.s32 %s26, 1
      %s28 = scalar_select %p25, %s26, %s27
      %p31 = pneg %p25
      %p32 = scmp.eq.s32.totalorder %s16, 1
      %p33 = por %p31, %p32
      %p34 = scmp.ne.s32.totalorder %s26, %s29
      %p35 = scmp.eq.s32.totalorder %s16, 0
      %p36 = por %p34, %p35
      %p37 = scmp.ne.s32.totalorder %s26, %s29
      %p38 = scmp.eq.s32.totalorder %s21, 1
      %p39 = por %p37, %p38
      %p40 = scmp.ne.s32.totalorder %s29, %s30
      %p41 = scmp.eq.s32.totalorder %s21, 0
      %p42 = por %p40, %p41
      %p43 = scmp.ne.s32.totalorder %s29, %s30
      %p44 = scmp.eq.s32.totalorder %s22, 1
      %p45 = por %p43, %p44
      %p47 = scmp.ne.s32.totalorder %s30, %s46
      %p48 = scmp.eq.s32.totalorder %s22, 0
      %p49 = por %p47, %p48
      %s51 = sadd.s32 %s50, 1
      %p54 = scmp.eq.s32.totalorder %s16, 1
      %p55 = scmp.ne.s32.totalorder %s50, %s52
      %p56 = scmp.eq.s32.totalorder %s16, 0
      %p57 = por %p55, %p56
      %p58 = scmp.ne.s32.totalorder %s50, %s52
      %p59 = scmp.eq.s32.totalorder %s21, 1
      %p60 = por %p58, %p59
      %p61 = scmp.ne.s32.totalorder %s52, %s53
      %p62 = scmp.eq.s32.totalorder %s21, 0
      %p63 = por %p61, %p62
      %p64 = scmp.ne.s32.totalorder %s52, %s53
      %p65 = scmp.eq.s32.totalorder %s22, 1
      %p66 = por %p64, %p65
      %p68 = scmp.ne.s32.totalorder %s53, %s67
      %p69 = scmp.eq.s32.totalorder %s22, 0
      %p70 = por %p68, %p69
      %s72 = sadd.s32 %s71, 1
      %p75 = scmp.eq.s32.totalorder %s16, 1
      %p76 = scmp.ne.s32.totalorder %s71, %s73
      %p77 = scmp.eq.s32.totalorder %s16, 0
      %p78 = por %p76, %p77
      %p79 = scmp.ne.s32.totalorder %s71, %s73
      %p80 = scmp.eq.s32.totalorder %s21, 1
      %p81 = por %p79, %p80
      %p82 = scmp.ne.s32.totalorder %s73, %s74
      %p83 = scmp.eq.s32.totalorder %s21, 0
      %p84 = por %p82, %p83
      %p85 = scmp.ne.s32.totalorder %s73, %s74
      %p86 = scmp.eq.s32.totalorder %s22, 1
      %p87 = por %p85, %p86
      %p89 = scmp.ne.s32.totalorder %s74, %s88
      %p90 = scmp.eq.s32.totalorder %s22, 0
      %p91 = por %p89, %p90
      %s93 = sadd.s32 %s92, 1
      %p96 = scmp.eq.s32.totalorder %s16, 1
      %p97 = scmp.ne.s32.totalorder %s92, %s94
      %p98 = scmp.eq.s32.totalorder %s16, 0
      %p99 = por %p97, %p98
      %p100 = scmp.ne.s32.totalorder %s92, %s94
      %p101 = scmp.eq.s32.totalorder %s21, 1
      %p102 = por %p100, %p101
      %p103 = scmp.ne.s32.totalorder %s94, %s95
      %p104 = scmp.eq.s32.totalorder %s21, 0
      %p105 = por %p103, %p104
      %p106 = scmp.ne.s32.totalorder %s94, %s95
      %p107 = scmp.eq.s32.totalorder %s22, 1
      %p108 = por %p106, %p107
      %p110 = scmp.ne.s32.totalorder %s95, %s109
      %p111 = scmp.eq.s32.totalorder %s22, 0
      %p112 = por %p110, %p111
      %s113 = ssub.s32 %s16, %s23
      %p114 = scmp.eq.s32.totalorder %s113, 0
      %s116 = sadd.s32 %s115, 1
      %s117 = scalar_select %p114, %s115, %s116
      %p120 = pneg %p114
      %p121 = scmp.eq.s32.totalorder %s16, 1
      %p122 = por %p120, %p121
      %p123 = scmp.ne.s32.totalorder %s115, %s118
      %p124 = scmp.eq.s32.totalorder %s16, 0
      %p125 = por %p123, %p124
      %p126 = scmp.ne.s32.totalorder %s115, %s118
      %p127 = scmp.eq.s32.totalorder %s21, 1
      %p128 = por %p126, %p127
      %p129 = scmp.ne.s32.totalorder %s118, %s119
      %p130 = scmp.eq.s32.totalorder %s21, 0
      %p131 = por %p129, %p130
      %p132 = scmp.ne.s32.totalorder %s118, %s119
      %p133 = scmp.eq.s32.totalorder %s22, 1
      %p134 = por %p132, %p133
      %p136 = scmp.ne.s32.totalorder %s119, %s135
      %p137 = scmp.eq.s32.totalorder %s22, 0
      %p138 = por %p136, %p137
      %p139 = scmp.le.s32.totalorder 1, %s16
      %p140 = scmp.lt.s32.totalorder %s16, 3
      %p141 = pnand %p139, %p140
      %p142 = pneg %p141
      // Predicated region
      $region9: #{tpu_custom_call.1} parent=5 // pred_check
        _
      $region10: #{tpu_custom_call.1} parent=5 // pred_check_branch
        %144 = sbr.rel (%p141) target = $region12
      $region11: #{tpu_custom_call.1} parent=5 // pred_region
        %s145 = ssub.s32 %s16, 1
        // Predicated region
        $region13: #{tpu_custom_call.1} parent=11 // pred_check
          %p146 = pneg %p63
        $region14: #{tpu_custom_call.1} parent=11 // pred_check_branch
          %148 = sbr.rel (%p146) target = $region16
        $region15: #{tpu_custom_call.1} parent=11 // pred_region
          _
        $region16: #{tpu_custom_call.1} parent=11 // pred_fallthru
          _
        // Predicated region
        $region17: #{tpu_custom_call.1} parent=11 // pred_check
          %p149 = pneg %p84
        $region18: #{tpu_custom_call.1} parent=11 // pred_check_branch
          %151 = sbr.rel (%p149) target = $region20
        $region19: #{tpu_custom_call.1} parent=11 // pred_region
          _
        $region20: #{tpu_custom_call.1} parent=11 // pred_fallthru
          _
        // Predicated region
        $region21: #{tpu_custom_call.1} parent=11 // pred_check
          %p152 = pneg %p105
        $region22: #{tpu_custom_call.1} parent=11 // pred_check_branch
          %154 = sbr.rel (%p152) target = $region24
        $region23: #{tpu_custom_call.1} parent=11 // pred_region
          _
        $region24: #{tpu_custom_call.1} parent=11 // pred_fallthru
          _
      $region12: #{tpu_custom_call.1} parent=5 // pred_fallthru
        _
      %p155 = scmp.lt.s32.totalorder %s16, 2
      // Predicated region
      $region25: #{tpu_custom_call.1} parent=5 // pred_check
        %p156 = pneg %p155
      $region26: #{tpu_custom_call.1} parent=5 // pred_check_branch
        %158 = sbr.rel (%p156) target = $region28
      $region27: #{tpu_custom_call.1} parent=5 // pred_region
        // Predicated region
        $region29: #{tpu_custom_call.1} parent=27 // pred_check
          %p159 = pneg %p36
        $region30: #{tpu_custom_call.1} parent=27 // pred_check_branch
          %161 = sbr.rel (%p159) target = $region32
        $region31: #{tpu_custom_call.1} parent=27 // pred_region
          %s162 = sand.u32 %s26, 1
          %s163 = scalar_lea.sflag [#allocation3], %s162
          %s164 = sand.u32 %s26, 1
          %s165 = smul.addr %s164, 128
          %s166 = scalar_lea.vmem [#allocation2], %s165
          %s168 = ssub.s32 2048, 2048
          %169 = vsyncadd %s163, %s168
          %s170 = smul.addr %s16, 16
          %s171 = smul.addr %s170, 128
          %s172 = scalar_lea.hbm %s0, %s171
          %s173 = sshll.u32 %s166, 4
          %s174 = int_to_ptr.vmem [resolvable:$true] %s173
          %179 = dma.hbm_to_vmem [thread:$0]  %s172, 2048, %s174, %s163, 128, 128, 8
        $region32: #{tpu_custom_call.1} parent=27 // pred_fallthru
          _
      $region28: #{tpu_custom_call.1} parent=5 // pred_fallthru
        _
      %p180 = scmp.le.s32.totalorder 1, %s16
      %p181 = scmp.lt.s32.totalorder %s16, 3
      %p182 = pnand %p180, %p181
      %p183 = pneg %p182
      // Predicated region
      $region33: #{tpu_custom_call.1} parent=5 // pred_check
        _
      $region34: #{tpu_custom_call.1} parent=5 // pred_check_branch
        %185 = sbr.rel (%p182) target = $region36
      $region35: #{tpu_custom_call.1} parent=5 // pred_region
        %s186 = ssub.s32 %s16, 1
        %s187 = sand.u32 %s29, 1
        %s188 = scalar_lea.sflag [#allocation3], %s187
        %s189 = sand.u32 %s29, 1
        %s190 = smul.addr %s189, 128
        %s191 = scalar_lea.vmem [#allocation2], %s190
        // Predicated region
        $region37: #{tpu_custom_call.1} parent=35 // pred_check
          %p192 = pneg %p42
        $region38: #{tpu_custom_call.1} parent=35 // pred_check_branch
          %194 = sbr.rel (%p192) target = $region40
        $region39: #{tpu_custom_call.1} parent=35 // pred_region
          %195 = dma.done %s188, 2048
        $region40: #{tpu_custom_call.1} parent=35 // pred_fallthru
          _
        %s196 = sand.u32 %s29, 1
        %s197 = scalar_lea.sflag [#allocation3], %s196
        %s198 = sand.u32 %s29, 1
        %s199 = smul.addr %s198, 128
        %s200 = scalar_lea.vmem [#allocation2], %s199
        %p201 = pneg %p42
        %p202 = pneg %p39
        %p203 = pneg %p63
        %p204 = pneg %p60
        %p205 = pneg %p84
        %p206 = pneg %p81
        %p207 = pneg %p105
        %p208 = pneg %p102
        %p209 = pneg %p131
        %p210 = pneg %p128
        %s211 = sand.u32 %s118, 1
        %s212 = scalar_lea.sflag [#allocation4], %s211
        %s213 = sand.u32 %s118, 1
        %s214 = smul.addr %s213, 128
        %s215 = scalar_lea.vmem [#allocation5], %s214
        %v216 = vld [vmem:[%s1] sm:$0xff]
        %v217 = vld [vmem:[%s1 + $0x8] sm:$0xff]
        %v218 = vld [vmem:[%s1 + $0x10] sm:$0xff]
        %v219 = vld [vmem:[%s1 + $0x18] sm:$0xff]
        %v220 = vld [vmem:[%s1 + $0x20] sm:$0xff]
        %v221 = vld [vmem:[%s1 + $0x28] sm:$0xff]
        %v222 = vld [vmem:[%s1 + $0x30] sm:$0xff]
        %v223 = vld [vmem:[%s1 + $0x38] sm:$0xff]
        %v224 = vld [vmem:[%s1 + $0x40] sm:$0xff]
        %v225 = vld [vmem:[%s1 + $0x48] sm:$0xff]
        %v226 = vld [vmem:[%s1 + $0x50] sm:$0xff]
        %v227 = vld [vmem:[%s1 + $0x58] sm:$0xff]
        %v228 = vld [vmem:[%s1 + $0x60] sm:$0xff]
        %v229 = vld [vmem:[%s1 + $0x68] sm:$0xff]
        %v230 = vld [vmem:[%s1 + $0x70] sm:$0xff]
        %v231 = vld [vmem:[%s1 + $0x78] sm:$0xff]
        %v232 = vld [vmem:[%s2] sm:$0xff]
        %v233 = vld [vmem:[%s3] sm:$0x1]
        %v235 = vlaneseq
        %v236 = vshrl.u32 %v235, 7
        %v237 = vsub.s32 0, %v236
        %v238 = vrot.slane %v233, %v237
        %vm240 = vcmask 64512
        %v242 = vsel %vm240, %v216, 0
        %v245 = vsel %vm240, %v217, 0
        %v248 = vsel %vm240, %v218, 0
        %v251 = vsel %vm240, %v219, 0
        %v254 = vsel %vm240, %v220, 0
        %v257 = vsel %vm240, %v221, 0
        %v260 = vsel %vm240, %v222, 0
        %v263 = vsel %vm240, %v223, 0
        %v266 = vsel %vm240, %v224, 0
        %v269 = vsel %vm240, %v225, 0
        %v272 = vsel %vm240, %v226, 0
        %v275 = vsel %vm240, %v227, 0
        %v278 = vsel %vm240, %v228, 0
        %v281 = vsel %vm240, %v229, 0
        %v284 = vsel %vm240, %v230, 0
        %v287 = vsel %vm240, %v231, 0
        %289 = vmatprep.subr.mxu0 0.0
        %290 = vmatpush1.msra.mxu0 0.0
        %291 = vmatprep.subr.mxu0 0.0
        %292 = vmatpush1.msra.mxu0 0.0
        %293 = vmatprep.subr.mxu0 0.0
        %294 = vmatpush1.msra.mxu0 0.0
        %295 = vmatprep.subr.mxu0 0.0
        %296 = vmatpush1.msra.mxu0 0.0
        %297 = vmatprep.subr.mxu0 0.0
        %298 = vmatpush1.msra.mxu0 0.0
        %299 = vmatprep.subr.mxu0 0.0
        %300 = vmatpush1.msra.mxu0 0.0
        %301 = vmatprep.subr.mxu0 0.0
        %302 = vmatpush1.msra.mxu0 0.0
        %303 = vmatprep.subr.mxu0 0.0
        %304 = vmatpush1.msra.mxu0 0.0
        %305 = vmatprep.subr.mxu0 0.0
        %306 = vmatpush1.msra.mxu0 0.0
        %307 = vmatprep.subr.mxu0 0.0
        %308 = vmatpush1.msra.mxu0 0.0
        %309 = vmatprep.subr.mxu0 0.0
        %310 = vmatpush1.msra.mxu0 0.0
        %311 = vmatprep.subr.mxu0 0.0
        %312 = vmatpush1.msra.mxu0 0.0
        %313 = vmatprep.subr.mxu0 0.0
        %314 = vmatpush1.msra.mxu0 0.0
        %315 = vmatprep.subr.mxu0 0.0
        %316 = vmatpush1.msra.mxu0 0.0
        %317 = vmatprep.subr.mxu0 0.0
        %318 = vmatpush1.msra.mxu0 0.0
        %319 = vmatprep.subr.mxu0 0.0
        %320 = vmatpush1.msra.mxu0 %v232
        %321 = vmatprep.subr.mxu0 0.0
        %322 = vmatpush2.msra.mxu0 0.0
        %323 = vmatprep.subr.mxu0 0.0
        %324 = vmatpush2.msra.mxu0 0.0
        %325 = vmatprep.subr.mxu0 0.0
        %326 = vmatpush2.msra.mxu0 0.0
        %327 = vmatprep.subr.mxu0 0.0
        %328 = vmatpush2.msra.mxu0 0.0
        %329 = vmatprep.subr.mxu0 0.0
        %330 = vmatpush2.msra.mxu0 0.0
        %331 = vmatprep.subr.mxu0 0.0
        %332 = vmatpush2.msra.mxu0 0.0
        %333 = vmatprep.subr.mxu0 0.0
        %334 = vmatpush2.msra.mxu0 0.0
        %335 = vmatprep.subr.mxu0 0.0
        %336 = vmatpush2.msra.mxu0 0.0
        %337 = vmatprep.subr.mxu0 0.0
        %338 = vmatpush2.msra.mxu0 0.0
        %339 = vmatprep.subr.mxu0 0.0
        %340 = vmatpush2.msra.mxu0 0.0
        %341 = vmatprep.subr.mxu0 0.0
        %342 = vmatpush2.msra.mxu0 0.0
        %343 = vmatprep.subr.mxu0 0.0
        %344 = vmatpush2.msra.mxu0 0.0
        %345 = vmatprep.subr.mxu0 0.0
        %346 = vmatpush2.msra.mxu0 0.0
        %347 = vmatprep.subr.mxu0 0.0
        %348 = vmatpush2.msra.mxu0 0.0
        %349 = vmatprep.subr.mxu0 0.0
        %350 = vmatpush2.msra.mxu0 0.0
        %351 = vmatprep.subr.mxu0 0.0
        %352 = vmatpush2.msra.mxu0 0.0
        %353 = vmatprep.mubr.f32.mxu0 0.0
        %354 = vmatmul.mubr.f32.gmra.mxu0 %v242
        %v355 = vpop.f32.mrf.mxu0
        %v356 = vadd.f32 %v238, %v355
        %v357 = vpop.f32.mrf.mxu0
        %358 = vmatprep.mubr.f32.mxu0 0.0
        %359 = vmatmul.mubr.f32.gmra.mxu0 %v245
        %v360 = vpop.f32.mrf.mxu0
        %v361 = vadd.f32 %v238, %v360
        %v362 = vpop.f32.mrf.mxu0
        %363 = vmatprep.mubr.f32.mxu0 0.0
        %364 = vmatmul.mubr.f32.gmra.mxu0 %v248
        %v365 = vpop.f32.mrf.mxu0
        %v366 = vadd.f32 %v238, %v365
        %v367 = vpop.f32.mrf.mxu0
        %368 = vmatprep.mubr.f32.mxu0 0.0
        %369 = vmatmul.mubr.f32.gmra.mxu0 %v251
        %v370 = vpop.f32.mrf.mxu0
        %v371 = vadd.f32 %v238, %v370
        %v372 = vpop.f32.mrf.mxu0
        %373 = vmatprep.mubr.f32.mxu0 0.0
        %374 = vmatmul.mubr.f32.gmra.mxu0 %v254
        %v375 = vpop.f32.mrf.mxu0
        %v376 = vadd.f32 %v238, %v375
        %v377 = vpop.f32.mrf.mxu0
        %378 = vmatprep.mubr.f32.mxu0 0.0
        %379 = vmatmul.mubr.f32.gmra.mxu0 %v257
        %v380 = vpop.f32.mrf.mxu0
        %v381 = vadd.f32 %v238, %v380
        %v382 = vpop.f32.mrf.mxu0
        %383 = vmatprep.mubr.f32.mxu0 0.0
        %384 = vmatmul.mubr.f32.gmra.mxu0 %v260
        %v385 = vpop.f32.mrf.mxu0
        %v386 = vadd.f32 %v238, %v385
        %v387 = vpop.f32.mrf.mxu0
        %388 = vmatprep.mubr.f32.mxu0 0.0
        %389 = vmatmul.mubr.f32.gmra.mxu0 %v263
        %v390 = vpop.f32.mrf.mxu0
        %v391 = vadd.f32 %v238, %v390
        %v392 = vpop.f32.mrf.mxu0
        %393 = vmatprep.mubr.f32.mxu0 0.0
        %394 = vmatmul.mubr.f32.gmra.mxu0 %v266
        %v395 = vpop.f32.mrf.mxu0
        %v396 = vadd.f32 %v238, %v395
        %v397 = vpop.f32.mrf.mxu0
        %398 = vmatprep.mubr.f32.mxu0 0.0
        %399 = vmatmul.mubr.f32.gmra.mxu0 %v269
        %v400 = vpop.f32.mrf.mxu0
        %v401 = vadd.f32 %v238, %v400
        %v402 = vpop.f32.mrf.mxu0
        %403 = vmatprep.mubr.f32.mxu0 0.0
        %404 = vmatmul.mubr.f32.gmra.mxu0 %v272
        %v405 = vpop.f32.mrf.mxu0
        %v406 = vadd.f32 %v238, %v405
        %v407 = vpop.f32.mrf.mxu0
        %408 = vmatprep.mubr.f32.mxu0 0.0
        %409 = vmatmul.mubr.f32.gmra.mxu0 %v275
        %v410 = vpop.f32.mrf.mxu0
        %v411 = vadd.f32 %v238, %v410
        %v412 = vpop.f32.mrf.mxu0
        %413 = vmatprep.mubr.f32.mxu0 0.0
        %414 = vmatmul.mubr.f32.gmra.mxu0 %v278
        %v415 = vpop.f32.mrf.mxu0
        %v416 = vadd.f32 %v238, %v415
        %v417 = vpop.f32.mrf.mxu0
        %418 = vmatprep.mubr.f32.mxu0 0.0
        %419 = vmatmul.mubr.f32.gmra.mxu0 %v281
        %v420 = vpop.f32.mrf.mxu0
        %v421 = vadd.f32 %v238, %v420
        %v422 = vpop.f32.mrf.mxu0
        %423 = vmatprep.mubr.f32.mxu0 0.0
        %424 = vmatmul.mubr.f32.gmra.mxu0 %v284
        %v425 = vpop.f32.mrf.mxu0
        %v426 = vadd.f32 %v238, %v425
        %v427 = vpop.f32.mrf.mxu0
        %428 = vmatprep.mubr.f32.mxu0 0.0
        %429 = vmatmul.mubr.f32.gmra.mxu0 %v287
        %v430 = vpop.f32.mrf.mxu0
        %v431 = vadd.f32 %v238, %v430
        %v432 = vpop.f32.mrf.mxu0
        %433 = vdwg.mxu0
        %v434 = vld [vmem:[%s191] sm:$0xff]
        %v435 = vld [vmem:[%s191 + $0x8] sm:$0xff]
        %v436 = vld [vmem:[%s191 + $0x10] sm:$0xff]
        %v437 = vld [vmem:[%s191 + $0x18] sm:$0xff]
        %v438 = vld [vmem:[%s191 + $0x20] sm:$0xff]
        %v439 = vld [vmem:[%s191 + $0x28] sm:$0xff]
        %v440 = vld [vmem:[%s191 + $0x30] sm:$0xff]
        %v441 = vld [vmem:[%s191 + $0x38] sm:$0xff]
        %v442 = vld [vmem:[%s191 + $0x40] sm:$0xff]
        %v443 = vld [vmem:[%s191 + $0x48] sm:$0xff]
        %v444 = vld [vmem:[%s191 + $0x50] sm:$0xff]
        %v445 = vld [vmem:[%s191 + $0x58] sm:$0xff]
        %v446 = vld [vmem:[%s191 + $0x60] sm:$0xff]
        %v447 = vld [vmem:[%s191 + $0x68] sm:$0xff]
        %v448 = vld [vmem:[%s191 + $0x70] sm:$0xff]
        %v449 = vld [vmem:[%s191 + $0x78] sm:$0xff]
        %v450 = vadd.f32 %v434, %v356
        %v451 = vadd.f32 %v435, %v361
        %v452 = vadd.f32 %v436, %v366
        %v453 = vadd.f32 %v437, %v371
        %v454 = vadd.f32 %v438, %v376
        %v455 = vadd.f32 %v439, %v381
        %v456 = vadd.f32 %v440, %v386
        %v457 = vadd.f32 %v441, %v391
        %v458 = vadd.f32 %v442, %v396
        %v459 = vadd.f32 %v443, %v401
        %v460 = vadd.f32 %v444, %v406
        %v461 = vadd.f32 %v445, %v411
        %v462 = vadd.f32 %v446, %v416
        %v463 = vadd.f32 %v447, %v421
        %v464 = vadd.f32 %v448, %v426
        %v465 = vadd.f32 %v449, %v431
        %466 = vst [vmem:[%s215] sm:$0xff] %v450
        %467 = vst [vmem:[%s215 + $0x8] sm:$0xff] %v451
        %468 = vst [vmem:[%s215 + $0x10] sm:$0xff] %v452
        %469 = vst [vmem:[%s215 + $0x18] sm:$0xff] %v453
        %470 = vst [vmem:[%s215 + $0x20] sm:$0xff] %v454
        %471 = vst [vmem:[%s215 + $0x28] sm:$0xff] %v455
        %472 = vst [vmem:[%s215 + $0x30] sm:$0xff] %v456
        %473 = vst [vmem:[%s215 + $0x38] sm:$0xff] %v457
        %474 = vst [vmem:[%s215 + $0x40] sm:$0xff] %v458
        %475 = vst [vmem:[%s215 + $0x48] sm:$0xff] %v459
        %476 = vst [vmem:[%s215 + $0x50] sm:$0xff] %v460
        %477 = vst [vmem:[%s215 + $0x58] sm:$0xff] %v461
        %478 = vst [vmem:[%s215 + $0x60] sm:$0xff] %v462
        %479 = vst [vmem:[%s215 + $0x68] sm:$0xff] %v463
        %480 = vst [vmem:[%s215 + $0x70] sm:$0xff] %v464
        %481 = vst [vmem:[%s215 + $0x78] sm:$0xff] %v465
        %s482 = sand.u32 %s118, 1
        %s483 = scalar_lea.sflag [#allocation4], %s482
        %s484 = sand.u32 %s118, 1
        %s485 = smul.addr %s484, 128
        %s486 = scalar_lea.vmem [#allocation5], %s485
        // Predicated region
        $region41: #{tpu_custom_call.1} parent=35 // pred_check
          %p487 = pneg %p128
        $region42: #{tpu_custom_call.1} parent=35 // pred_check_branch
          %489 = sbr.rel (%p487) target = $region44
        $region43: #{tpu_custom_call.1} parent=35 // pred_region
          %s491 = ssub.s32 2048, 2048
          %492 = vsyncadd %s483, %s491
          %s493 = smul.addr %s21, 16
          %s494 = smul.addr %s493, 128
          %s495 = scalar_lea.hbm %s4, %s494
          %s496 = sshll.u32 %s486, 4
          %s497 = int_to_ptr.vmem [resolvable:$true] %s496
          %502 = dma.vmem_to_hbm [thread:$0]  %s497, 2048, %s495, %s483, 128, 128, 8
        $region44: #{tpu_custom_call.1} parent=35 // pred_fallthru
          _
      $region36: #{tpu_custom_call.1} parent=5 // pred_fallthru
        _
      %p503 = scmp.le.s32.totalorder 2, %s16
      // Predicated region
      $region45: #{tpu_custom_call.1} parent=5 // pred_check
        %p504 = pneg %p503
      $region46: #{tpu_custom_call.1} parent=5 // pred_check_branch
        %506 = sbr.rel (%p504) target = $region48
      $region47: #{tpu_custom_call.1} parent=5 // pred_region
        %s507 = ssub.s32 %s16, 2
        // Predicated region
        $region49: #{tpu_custom_call.1} parent=47 // pred_check
          %p508 = pneg %p134
        $region50: #{tpu_custom_call.1} parent=47 // pred_check_branch
          %510 = sbr.rel (%p508) target = $region52
        $region51: #{tpu_custom_call.1} parent=47 // pred_region
          %s511 = sand.u32 %s119, 1
          %s512 = scalar_lea.sflag [#allocation4], %s511
          %s513 = sand.u32 %s119, 1
          %s514 = smul.addr %s513, 128
          %s515 = scalar_lea.vmem [#allocation5], %s514
          %516 = dma.done %s512, 2048
        $region52: #{tpu_custom_call.1} parent=47 // pred_fallthru
          _
      $region48: #{tpu_custom_call.1} parent=5 // pred_fallthru
        _
    $region6: #{tpu_custom_call.1} parent=1 // loop_footer
      %s20 = sadd.s32 1, %s16
    $region7: #{tpu_custom_call.1} parent=1 // loop_footer_branch
      %15 = sbr.rel target = $region3
    $region8: #{tpu_custom_call.1} parent=1 // loop_exit
      _
    %517 = vsyncpa [#allocation3], 1
    %s518 = scalar_lea.sflag [#allocation3], 1
    %519 = vsyncpa %s518, 1
    %520 = vsyncpa [#allocation4], 1
    %s521 = scalar_lea.sflag [#allocation4], 1
    %522 = vsyncpa %s521, 1

</llo_original>
